<compile_context>
chip_gen: v7x
topology: tpu7x:2x2x1
jax: 0.10.0
libtpu: 0.0.40
codegen_flags: <defaults>
</compile_context>

<pallas_src>
import jax
import jax.numpy as jnp
from jax import lax
from jax.experimental import pallas as pl
from jax.experimental.pallas import tpu as pltpu


_LANES = 128
_VMEM_WORKSET_BUDGET = 24 * 1024 * 1024   # double-buffered in+out bytes / step
_VMEM_LIMIT_BYTES = 48 * 1024 * 1024      # raised scoped-VMEM limit (all gens)


def _pick_chunk(r_tile, cin):
    """Rows processed per inner-loop step: divides r_tile, bounded vreg use."""
    if r_tile % 8 != 0:
        return r_tile                       # tiny full-extent tile (< 8 rows)
    for c in (64, 32, 16, 8):
        # live f32 vregs ~ (cin inputs + acc + slack) * c / 8  -> keep <= ~32
        if r_tile % c == 0 and (cin + 2) * c <= 256:
            return c
    return 8


def _choose_r_tile(R, cin, cout, itemsize, n_batch):
    """Rows (of 128 lanes) per grid step, bounded by the VMEM working-set budget."""
    bytes_per_row = (cin + cout) * _LANES * itemsize * 2     # double-buffered
    max_rows = _VMEM_WORKSET_BUDGET // bytes_per_row
    max_rows = max(8, (max_rows // 8) * 8)
    r_tile = min(R, max_rows)
    # v7x megacore: ensure >= 2 parallel grid steps when the batch is 1.
    if n_batch == 1 and R >= 16:
        half = -(-R // 2)                   # ceil(R / 2)
        half = -(-half // 8) * 8            # round up to a multiple of 8
        r_tile = min(r_tile, half)
    if r_tile < R:
        r_tile = max(8, (r_tile // 8) * 8)  # blocked dims need /8 (or full extent)
    return r_tile


def _outconv_kernel(x_ref, w_ref, b_ref, o_ref):
    # x_ref: (Cin, R_tile, 128) VMEM    w_ref: (Cout*Cin,) SMEM
    # b_ref: (Cout,) SMEM               o_ref: (Cout, R_tile, 128) VMEM
    cin, r_tile, lanes = x_ref.shape
    cout = o_ref.shape[0]
    chunk = _pick_chunk(r_tile, cin)
    n_chunks = r_tile // chunk

    # Hoist scalar param reads / bias broadcasts out of the row loop.
    w_sc = [[w_ref[co * cin + ci] for ci in range(cin)] for co in range(cout)]
    b_rows = [jnp.full((chunk, lanes), b_ref[co], dtype=jnp.float32)
              for co in range(cout)]

    def body(c, carry):
        r0 = c * chunk
        if not isinstance(r0, int):
            r0 = pl.multiple_of(r0, chunk)
        # Load + cast each input-channel slab exactly once per chunk.
        xs = [x_ref[ci, pl.ds(r0, chunk), :].astype(jnp.float32)
              for ci in range(cin)]
        for co in range(cout):               # unrolled at trace time
            acc = b_rows[co]                 # bias folded into the init
            for ci in range(cin):
                acc = acc + w_sc[co][ci] * xs[ci]
            # Store each finished output channel immediately (dense vst,
            # no concatenate, minimal live vregs).
            o_ref[co, pl.ds(r0, chunk), :] = acc.astype(o_ref.dtype)
        return carry

    if n_chunks == 1:
        body(0, 0)
    else:
        lax.fori_loop(0, n_chunks, body, 0)


def outconv_1x1(x_nchw, weight, bias):
    """1x1 Conv2d forward (same semantics as torch.nn.Conv2d(kernel_size=1)).

    x_nchw: (N, C_in, H, W)
    weight: (C_out, C_in)   -- squeezed from PyTorch's (C_out, C_in, 1, 1)
    bias:   (C_out,)
    returns (N, C_out, H, W)
    """
    N, Cin, H, W = x_nchw.shape
    Cout = weight.shape[0]
    HW = H * W
    itemsize = jnp.dtype(x_nchw.dtype).itemsize

    # Lane-dense 3-D view of the spatial axis: (N, Cin, R, 128).
    R = pl.cdiv(HW, _LANES)
    HW_pad = R * _LANES
    x_flat = x_nchw.reshape(N, Cin, HW)
    if HW_pad != HW:
        x_flat = jnp.pad(x_flat, ((0, 0), (0, 0), (0, HW_pad - HW)))
    x4 = x_flat.reshape(N, Cin, R, _LANES)

    r_tile = _choose_r_tile(R, Cin, Cout, itemsize, N)
    grid = (N, pl.cdiv(R, r_tile))

    w_flat = weight.astype(jnp.float32).reshape(-1)   # (Cout*Cin,) 1-D -> SMEM
    b = bias.astype(jnp.float32)                      # (Cout,)        -> SMEM

    bytes_accessed = (N * (Cin + Cout) * HW_pad * itemsize
                      + (Cout * Cin + Cout) * 4)

    out4 = pl.pallas_call(
        _outconv_kernel,
        out_shape=jax.ShapeDtypeStruct((N, Cout, R, _LANES), x_nchw.dtype),
        grid_spec=pltpu.PrefetchScalarGridSpec(
            num_scalar_prefetch=0,
            grid=grid,
            in_specs=[
                pl.BlockSpec((None, Cin, r_tile, _LANES),
                             lambda n, s: (n, 0, s, 0)),
                pl.BlockSpec(memory_space=pltpu.MemorySpace.SMEM),  # weight
                pl.BlockSpec(memory_space=pltpu.MemorySpace.SMEM),  # bias
            ],
            out_specs=pl.BlockSpec((None, Cout, r_tile, _LANES),
                                   lambda n, s: (n, 0, s, 0)),
        ),
        compiler_params=pltpu.CompilerParams(
            dimension_semantics=("parallel", "parallel"),
            vmem_limit_bytes=_VMEM_LIMIT_BYTES,
        ),
        cost_estimate=pl.CostEstimate(
            flops=2 * N * HW * Cin * Cout,
            transcendentals=0,
            bytes_accessed=bytes_accessed,
        ),
    )(x4, w_flat, b)

    out_flat = out4.reshape(N, Cout, HW_pad)
    if HW_pad != HW:
        out_flat = out_flat[:, :, :HW]
    return out_flat.reshape(N, Cout, H, W)


if __name__ == "__main__":
    key = jax.random.PRNGKey(0)
    k_x, k_w, k_b = jax.random.split(key, 3)

    N, Cin, H, W = 2, 4, 16, 16
    Cout = 3

    x = jax.random.normal(k_x, (N, Cin, H, W), dtype=jnp.float32)
    # Deterministic synthetic parameters (PyTorch shapes: (Cout, Cin, 1, 1), (Cout,))
    bound = 1.0 / (Cin ** 0.5)
    weight = jax.random.uniform(k_w, (Cout, Cin), minval=-bound, maxval=bound,
                                dtype=jnp.float32)
    bias = jax.random.uniform(k_b, (Cout,), minval=-bound, maxval=bound,
                              dtype=jnp.float32)

    out = outconv_1x1(x, weight, bias)
    out = jax.block_until_ready(out)

    # Sanity check against a pure-JAX reference of the 1x1 conv.
    ref = jnp.einsum("nchw,oc->nohw", x, weight) + bias[None, :, None, None]
    assert out.shape == (N, Cout, H, W)
    assert jnp.allclose(out, ref, atol=1e-5, rtol=1e-5)

    print("KERNEL_OK")
</pallas_src>

<mosaic_0001>
module attributes {stable_mosaic.version = 11 : i64} {
  func.func @_outconv_kernel(%arg0: i32, %arg1: i32, %arg2: memref<1x4x2x128xf32, #tpu.memory_space<vmem>>, %arg3: memref<12xf32, #tpu.memory_space<smem>>, %arg4: memref<3xf32, #tpu.memory_space<smem>>, %arg5: memref<1x3x2x128xf32, #tpu.memory_space<vmem>>) attributes {dimension_semantics = [#tpu.dimension_semantics<parallel>, #tpu.dimension_semantics<parallel>], iteration_bounds = array<i64: 2, 1>, scalar_prefetch = 0 : i64, scratch_operands = 0 : i64, tpu.core_type = #tpu.core_type<tc>, window_params = [{transform_indices = @transform_0, window_bounds = array<i64: 1, 4, 2, 128>}, {transform_indices = @transform_1, window_bounds = array<i64: 12>}, {transform_indices = @transform_2, window_bounds = array<i64: 3>}, {transform_indices = @transform_3, window_bounds = array<i64: 1, 3, 2, 128>}]} {
    %c0 = arith.constant 0 : index
    %0 = memref.load %arg3[%c0] : memref<12xf32, #tpu.memory_space<smem>>
    %c1 = arith.constant 1 : index
    %1 = memref.load %arg3[%c1] : memref<12xf32, #tpu.memory_space<smem>>
    %c2 = arith.constant 2 : index
    %2 = memref.load %arg3[%c2] : memref<12xf32, #tpu.memory_space<smem>>
    %c3 = arith.constant 3 : index
    %3 = memref.load %arg3[%c3] : memref<12xf32, #tpu.memory_space<smem>>
    %c4 = arith.constant 4 : index
    %4 = memref.load %arg3[%c4] : memref<12xf32, #tpu.memory_space<smem>>
    %c5 = arith.constant 5 : index
    %5 = memref.load %arg3[%c5] : memref<12xf32, #tpu.memory_space<smem>>
    %c6 = arith.constant 6 : index
    %6 = memref.load %arg3[%c6] : memref<12xf32, #tpu.memory_space<smem>>
    %c7 = arith.constant 7 : index
    %7 = memref.load %arg3[%c7] : memref<12xf32, #tpu.memory_space<smem>>
    %c8 = arith.constant 8 : index
    %8 = memref.load %arg3[%c8] : memref<12xf32, #tpu.memory_space<smem>>
    %c9 = arith.constant 9 : index
    %9 = memref.load %arg3[%c9] : memref<12xf32, #tpu.memory_space<smem>>
    %c10 = arith.constant 10 : index
    %10 = memref.load %arg3[%c10] : memref<12xf32, #tpu.memory_space<smem>>
    %c11 = arith.constant 11 : index
    %11 = memref.load %arg3[%c11] : memref<12xf32, #tpu.memory_space<smem>>
    %c0_0 = arith.constant 0 : index
    %12 = memref.load %arg4[%c0_0] : memref<3xf32, #tpu.memory_space<smem>>
    %13 = vector.broadcast %12 : f32 to vector<2x128xf32>
    %c1_1 = arith.constant 1 : index
    %14 = memref.load %arg4[%c1_1] : memref<3xf32, #tpu.memory_space<smem>>
    %15 = vector.broadcast %14 : f32 to vector<2x128xf32>
    %c2_2 = arith.constant 2 : index
    %16 = memref.load %arg4[%c2_2] : memref<3xf32, #tpu.memory_space<smem>>
    %17 = vector.broadcast %16 : f32 to vector<2x128xf32>
    %c0_3 = arith.constant 0 : index
    %c0_4 = arith.constant 0 : index
    %c0_5 = arith.constant 0 : index
    %c0_6 = arith.constant 0 : index
    %18 = vector.load %arg2[%c0_3, %c0_4, %c0_5, %c0_6] : memref<1x4x2x128xf32, #tpu.memory_space<vmem>>, vector<1x1x2x128xf32>
    %19 = vector.shape_cast %18 : vector<1x1x2x128xf32> to vector<2x128xf32>
    %c0_7 = arith.constant 0 : index
    %c1_8 = arith.constant 1 : index
    %c0_9 = arith.constant 0 : index
    %c0_10 = arith.constant 0 : index
    %20 = vector.load %arg2[%c0_7, %c1_8, %c0_9, %c0_10] : memref<1x4x2x128xf32, #tpu.memory_space<vmem>>, vector<1x1x2x128xf32>
    %21 = vector.shape_cast %20 : vector<1x1x2x128xf32> to vector<2x128xf32>
    %c0_11 = arith.constant 0 : index
    %c2_12 = arith.constant 2 : index
    %c0_13 = arith.constant 0 : index
    %c0_14 = arith.constant 0 : index
    %22 = vector.load %arg2[%c0_11, %c2_12, %c0_13, %c0_14] : memref<1x4x2x128xf32, #tpu.memory_space<vmem>>, vector<1x1x2x128xf32>
    %23 = vector.shape_cast %22 : vector<1x1x2x128xf32> to vector<2x128xf32>
    %c0_15 = arith.constant 0 : index
    %c3_16 = arith.constant 3 : index
    %c0_17 = arith.constant 0 : index
    %c0_18 = arith.constant 0 : index
    %24 = vector.load %arg2[%c0_15, %c3_16, %c0_17, %c0_18] : memref<1x4x2x128xf32, #tpu.memory_space<vmem>>, vector<1x1x2x128xf32>
    %25 = vector.shape_cast %24 : vector<1x1x2x128xf32> to vector<2x128xf32>
    %26 = vector.broadcast %0 : f32 to vector<2x128xf32>
    %27 = arith.mulf %26, %19 : vector<2x128xf32>
    %28 = arith.addf %13, %27 : vector<2x128xf32>
    %29 = vector.broadcast %1 : f32 to vector<2x128xf32>
    %30 = arith.mulf %29, %21 : vector<2x128xf32>
    %31 = arith.addf %28, %30 : vector<2x128xf32>
    %32 = vector.broadcast %2 : f32 to vector<2x128xf32>
    %33 = arith.mulf %32, %23 : vector<2x128xf32>
    %34 = arith.addf %31, %33 : vector<2x128xf32>
    %35 = vector.broadcast %3 : f32 to vector<2x128xf32>
    %36 = arith.mulf %35, %25 : vector<2x128xf32>
    %37 = arith.addf %34, %36 : vector<2x128xf32>
    %c0_19 = arith.constant 0 : index
    %c0_20 = arith.constant 0 : index
    %c0_21 = arith.constant 0 : index
    %c0_22 = arith.constant 0 : index
    %38 = vector.load %arg5[%c0_19, %c0_20, %c0_21, %c0_22] : memref<1x3x2x128xf32, #tpu.memory_space<vmem>>, vector<1x1x2x128xf32>
    %39 = vector.shape_cast %38 : vector<1x1x2x128xf32> to vector<2x128xf32>
    %40 = vector.shape_cast %37 : vector<2x128xf32> to vector<1x1x2x128xf32>
    tpu.vector_store %arg5[%c0_19, %c0_20, %c0_21, %c0_22], %40 {strides = array<i32>} : memref<1x3x2x128xf32, #tpu.memory_space<vmem>>, vector<1x1x2x128xf32>,
    %41 = vector.broadcast %4 : f32 to vector<2x128xf32>
    %42 = arith.mulf %41, %19 : vector<2x128xf32>
    %43 = arith.addf %15, %42 : vector<2x128xf32>
    %44 = vector.broadcast %5 : f32 to vector<2x128xf32>
    %45 = arith.mulf %44, %21 : vector<2x128xf32>
    %46 = arith.addf %43, %45 : vector<2x128xf32>
    %47 = vector.broadcast %6 : f32 to vector<2x128xf32>
    %48 = arith.mulf %47, %23 : vector<2x128xf32>
    %49 = arith.addf %46, %48 : vector<2x128xf32>
    %50 = vector.broadcast %7 : f32 to vector<2x128xf32>
    %51 = arith.mulf %50, %25 : vector<2x128xf32>
    %52 = arith.addf %49, %51 : vector<2x128xf32>
    %c0_23 = arith.constant 0 : index
    %c1_24 = arith.constant 1 : index
    %c0_25 = arith.constant 0 : index
    %c0_26 = arith.constant 0 : index
    %53 = vector.load %arg5[%c0_23, %c1_24, %c0_25, %c0_26] : memref<1x3x2x128xf32, #tpu.memory_space<vmem>>, vector<1x1x2x128xf32>
    %54 = vector.shape_cast %53 : vector<1x1x2x128xf32> to vector<2x128xf32>
    %55 = vector.shape_cast %52 : vector<2x128xf32> to vector<1x1x2x128xf32>
    tpu.vector_store %arg5[%c0_23, %c1_24, %c0_25, %c0_26], %55 {strides = array<i32>} : memref<1x3x2x128xf32, #tpu.memory_space<vmem>>, vector<1x1x2x128xf32>,
    %56 = vector.broadcast %8 : f32 to vector<2x128xf32>
    %57 = arith.mulf %56, %19 : vector<2x128xf32>
    %58 = arith.addf %17, %57 : vector<2x128xf32>
    %59 = vector.broadcast %9 : f32 to vector<2x128xf32>
    %60 = arith.mulf %59, %21 : vector<2x128xf32>
    %61 = arith.addf %58, %60 : vector<2x128xf32>
    %62 = vector.broadcast %10 : f32 to vector<2x128xf32>
    %63 = arith.mulf %62, %23 : vector<2x128xf32>
    %64 = arith.addf %61, %63 : vector<2x128xf32>
    %65 = vector.broadcast %11 : f32 to vector<2x128xf32>
    %66 = arith.mulf %65, %25 : vector<2x128xf32>
    %67 = arith.addf %64, %66 : vector<2x128xf32>
    %c0_27 = arith.constant 0 : index
    %c2_28 = arith.constant 2 : index
    %c0_29 = arith.constant 0 : index
    %c0_30 = arith.constant 0 : index
    %68 = vector.load %arg5[%c0_27, %c2_28, %c0_29, %c0_30] : memref<1x3x2x128xf32, #tpu.memory_space<vmem>>, vector<1x1x2x128xf32>
    %69 = vector.shape_cast %68 : vector<1x1x2x128xf32> to vector<2x128xf32>
    %70 = vector.shape_cast %67 : vector<2x128xf32> to vector<1x1x2x128xf32>
    tpu.vector_store %arg5[%c0_27, %c2_28, %c0_29, %c0_30], %70 {strides = array<i32>} : memref<1x3x2x128xf32, #tpu.memory_space<vmem>>, vector<1x1x2x128xf32>,
    return
  }
  func.func @transform_0(%arg0: i32, %arg1: i32) -> (i32, i32, i32, i32) {
    %c0_i32 = arith.constant 0 : i32
    %c0_i32_0 = arith.constant 0 : i32
    %c0_i32_1 = arith.constant 0 : i32
    return %arg0, %c0_i32, %arg1, %c0_i32_0 : i32, i32, i32, i32
  }
  func.func @transform_1(%arg0: i32, %arg1: i32) -> i32 {
    %c0_i32 = arith.constant 0 : i32
    %c0_i32_0 = arith.constant 0 : i32
    return %c0_i32 : i32
  }
  func.func @transform_2(%arg0: i32, %arg1: i32) -> i32 {
    %c0_i32 = arith.constant 0 : i32
    %c0_i32_0 = arith.constant 0 : i32
    return %c0_i32 : i32
  }
  func.func @transform_3(%arg0: i32, %arg1: i32) -> (i32, i32, i32, i32) {
    %c0_i32 = arith.constant 0 : i32
    %c0_i32_0 = arith.constant 0 : i32
    %c0_i32_1 = arith.constant 0 : i32
    return %arg0, %c0_i32, %arg1, %c0_i32_0 : i32, i32, i32, i32
  }
}

</mosaic_0001>

<llo_original>
// kernel: tpu_custom_call.1
$region0: #{tpu_custom_call.1}
  #allocation0 [shape = 'u32[]', space=smem, size = 0x4, offset = 0x4, fixed_abs, tag = 'smem constant byte address 0x4 - core index']
  #allocation1 [shape = 'u32[144,128]{1,0:T(1,128)}', space=vmem, size = 0x12000, scoped, tag = 'internal scratch']
  %s0 = inlined_call_operand.hbm [shape: f32[2,4,2,128], index: 0, kind: input, shape index: {}]
  %s1 = inlined_call_operand.vmem [shape: f32[12], index: 1, kind: input, shape index: {}]
  %s2 = inlined_call_operand.vmem [shape: f32[3], index: 2, kind: input, shape index: {}]
  %s3 = inlined_call_operand.hbm [shape: f32[2,3,2,128], index: 3, kind: output, shape index: {}]
  %s4 = sld [smem:[#allocation0]]
  $region57: #{tpu_custom_call.1} parent=0
    _
  %s6 = ssub.s32 1, %s4
  %s7 = scalar_select 0, %s6, %s4
  $region1: #{tpu_custom_call.1} parent=0
    #allocation2 [shape = 'u8[8192]{0}', space=vmem, size = 0x2000, scoped, tag = 'input window, operand 0']
    #allocation3 [shape = 's32[2]{0}', space=sflag, size = 0x8, scoped, tag = 'scoped memory for tpu_custom_call.1']
    #allocation4 [shape = 's32[2]{0}', space=sflag, size = 0x8, scoped, tag = 'scoped memory for tpu_custom_call.1']
    #allocation5 [shape = 's32[2]{0}', space=sflag, size = 0x8, scoped, tag = 'scoped memory for tpu_custom_call.1']
    #allocation6 [shape = 'u8[512]{0}', space=smem, size = 0x200, scoped, tag = 'input window, operand 1, single buffered']
    #allocation7 [shape = 'u8[512]{0}', space=smem, size = 0x200, scoped, tag = 'input window, operand 2, single buffered']
    #allocation8 [shape = 's32[1]{0}', space=sflag, size = 0x4, scoped, tag = 'scoped memory for tpu_custom_call.1']
    #allocation9 [shape = 'u8[6144]{0}', space=vmem, size = 0x1800, scoped, tag = 'output window, operand 0']
    %8 = vsyncpa [#allocation3], 0
    %s9 = scalar_lea.sflag [#allocation3], 1
    %10 = vsyncpa %s9, 0
    %11 = vsyncpa [#allocation5], 0
    %12 = vsyncpa [#allocation8], 0
    %13 = vsyncpa [#allocation4], 0
    %s14 = scalar_lea.sflag [#allocation4], 1
    %15 = vsyncpa %s14, 0
    loop: start=0, step=1, limit=4
    $region2: #{tpu_custom_call.1} parent=1 // loop_pre_header
      _
    $region3: #{tpu_custom_call.1} parent=1 // loop_header
      %s17 = sphi 0, %s21
      %p18 = scmp.ge.s32.totalorder %s17, 4
      %s24 = sphi 0, %s36
      %s25 = sphi 0, %s32
      %s26 = sphi 0, %s24
      %s27 = sphi 0, %s25
      %s28 = sphi 0, %s26
      %s29 = sphi 0, %s27
      %s41 = sphi 0, %s43
      %s44 = sphi 0, %s41
      %s45 = sphi 0, %s44
      %s61 = sphi 0, %s45
      %s65 = sphi 0, %s65
      %s67 = sphi 0, %s65
      %s68 = sphi 0, %s67
      %s82 = sphi 0, %s68
      %s86 = sphi 0, %s86
      %s88 = sphi 0, %s86
      %s89 = sphi 0, %s88
      %s103 = sphi 0, %s89
      %s111 = sphi 0, %s113
      %s114 = sphi 0, %s111
      %s115 = sphi 0, %s114
      %s131 = sphi 0, %s115
    $region4: #{tpu_custom_call.1} parent=1 // loop_header_branch
      %20 = sbr.rel (%p18) target = $region8
    $region5: #{tpu_custom_call.1} parent=1 // loop_body
      %s22 = ssub.s32 %s17, 1
      %s23 = ssub.s32 %s17, 2
      %s30 = sadd.s32 1, %s25
      %p31 = scmp.ge.s32.totalorder %s30, 1
      %s32 = scalar_select %p31, 0, %s30
      %s33 = sadd.s32 1, %s24
      %s34 = scalar_select %p31, %s33, %s24
      %p35 = scmp.ge.s32.totalorder %s34, 2
      %s36 = scalar_select %p35, 0, %s34
      %s37 = ssub.s32 %s24, %s36
      %s38 = ssub.s32 %s25, %s32
      %s39 = sor.u32 %s37, %s38
      %p40 = scmp.eq.s32.totalorder %s39, 0
      %s42 = sadd.s32 %s41, 1
      %s43 = scalar_select %p40, %s41, %s42
      %p46 = pneg %p40
      %p47 = scmp.eq.s32.totalorder %s17, 1
      %p48 = por %p46, %p47
      %p49 = scmp.ne.s32.totalorder %s41, %s44
      %p50 = scmp.eq.s32.totalorder %s17, 0
      %p51 = por %p49, %p50
      %p52 = scmp.ne.s32.totalorder %s41, %s44
      %p53 = scmp.eq.s32.totalorder %s22, 1
      %p54 = por %p52, %p53
      %p55 = scmp.ne.s32.totalorder %s44, %s45
      %p56 = scmp.eq.s32.totalorder %s22, 0
      %p57 = por %p55, %p56
      %p58 = scmp.ne.s32.totalorder %s44, %s45
      %p59 = scmp.eq.s32.totalorder %s23, 1
      %p60 = por %p58, %p59
      %p62 = scmp.ne.s32.totalorder %s45, %s61
      %p63 = scmp.eq.s32.totalorder %s23, 0
      %p64 = por %p62, %p63
      %s66 = sadd.s32 %s65, 1
      %p69 = scmp.eq.s32.totalorder %s17, 1
      %p70 = scmp.ne.s32.totalorder %s65, %s67
      %p71 = scmp.eq.s32.totalorder %s17, 0
      %p72 = por %p70, %p71
      %p73 = scmp.ne.s32.totalorder %s65, %s67
      %p74 = scmp.eq.s32.totalorder %s22, 1
      %p75 = por %p73, %p74
      %p76 = scmp.ne.s32.totalorder %s67, %s68
      %p77 = scmp.eq.s32.totalorder %s22, 0
      %p78 = por %p76, %p77
      %p79 = scmp.ne.s32.totalorder %s67, %s68
      %p80 = scmp.eq.s32.totalorder %s23, 1
      %p81 = por %p79, %p80
      %p83 = scmp.ne.s32.totalorder %s68, %s82
      %p84 = scmp.eq.s32.totalorder %s23, 0
      %p85 = por %p83, %p84
      %s87 = sadd.s32 %s86, 1
      %p90 = scmp.eq.s32.totalorder %s17, 1
      %p91 = scmp.ne.s32.totalorder %s86, %s88
      %p92 = scmp.eq.s32.totalorder %s17, 0
      %p93 = por %p91, %p92
      %p94 = scmp.ne.s32.totalorder %s86, %s88
      %p95 = scmp.eq.s32.totalorder %s22, 1
      %p96 = por %p94, %p95
      %p97 = scmp.ne.s32.totalorder %s88, %s89
      %p98 = scmp.eq.s32.totalorder %s22, 0
      %p99 = por %p97, %p98
      %p100 = scmp.ne.s32.totalorder %s88, %s89
      %p101 = scmp.eq.s32.totalorder %s23, 1
      %p102 = por %p100, %p101
      %p104 = scmp.ne.s32.totalorder %s89, %s103
      %p105 = scmp.eq.s32.totalorder %s23, 0
      %p106 = por %p104, %p105
      %s107 = ssub.s32 %s24, %s36
      %s108 = ssub.s32 %s25, %s32
      %s109 = sor.u32 %s107, %s108
      %p110 = scmp.eq.s32.totalorder %s109, 0
      %s112 = sadd.s32 %s111, 1
      %s113 = scalar_select %p110, %s111, %s112
      %p116 = pneg %p110
      %p117 = scmp.eq.s32.totalorder %s17, 1
      %p118 = por %p116, %p117
      %p119 = scmp.ne.s32.totalorder %s111, %s114
      %p120 = scmp.eq.s32.totalorder %s17, 0
      %p121 = por %p119, %p120
      %p122 = scmp.ne.s32.totalorder %s111, %s114
      %p123 = scmp.eq.s32.totalorder %s22, 1
      %p124 = por %p122, %p123
      %p125 = scmp.ne.s32.totalorder %s114, %s115
      %p126 = scmp.eq.s32.totalorder %s22, 0
      %p127 = por %p125, %p126
      %p128 = scmp.ne.s32.totalorder %s114, %s115
      %p129 = scmp.eq.s32.totalorder %s23, 1
      %p130 = por %p128, %p129
      %p132 = scmp.ne.s32.totalorder %s115, %s131
      %p133 = scmp.eq.s32.totalorder %s23, 0
      %p134 = por %p132, %p133
      %p135 = scmp.le.s32.totalorder 1, %s17
      %p136 = scmp.lt.s32.totalorder %s17, 3
      %p137 = pnand %p135, %p136
      %p138 = pneg %p137
      // Predicated region
      $region9: #{tpu_custom_call.1} parent=5 // pred_check
        _
      $region10: #{tpu_custom_call.1} parent=5 // pred_check_branch
        %140 = sbr.rel (%p137) target = $region12
      $region11: #{tpu_custom_call.1} parent=5 // pred_region
        %s141 = ssub.s32 %s17, 1
        // Predicated region
        $region13: #{tpu_custom_call.1} parent=11 // pred_check
          %p142 = pneg %p78
        $region14: #{tpu_custom_call.1} parent=11 // pred_check_branch
          %144 = sbr.rel (%p142) target = $region16
        $region15: #{tpu_custom_call.1} parent=11 // pred_region
          %s146 = ssub.s32 16, 16
          %147 = vsyncadd [#allocation5], %s146
          %s149 = sshll.u32 %s1, 4
          %s150 = int_to_ptr.vmem [resolvable:$true] %s149
          %152 = dma.vmem_to_smem %s150, 16, [#allocation6], [#allocation5]
        $region16: #{tpu_custom_call.1} parent=11 // pred_fallthru
          _
        // Predicated region
        $region17: #{tpu_custom_call.1} parent=11 // pred_check
          %p153 = pneg %p99
        $region18: #{tpu_custom_call.1} parent=11 // pred_check_branch
          %155 = sbr.rel (%p153) target = $region20
        $region19: #{tpu_custom_call.1} parent=11 // pred_region
          %s157 = ssub.s32 16, 16
          %158 = vsyncadd [#allocation8], %s157
          %s160 = sshll.u32 %s2, 4
          %s161 = int_to_ptr.vmem [resolvable:$true] %s160
          %163 = dma.vmem_to_smem %s161, 16, [#allocation7], [#allocation8]
        $region20: #{tpu_custom_call.1} parent=11 // pred_fallthru
          _
      $region12: #{tpu_custom_call.1} parent=5 // pred_fallthru
        _
      %p164 = scmp.lt.s32.totalorder %s17, 2
      // Predicated region
      $region21: #{tpu_custom_call.1} parent=5 // pred_check
        %p165 = pneg %p164
      $region22: #{tpu_custom_call.1} parent=5 // pred_check_branch
        %167 = sbr.rel (%p165) target = $region24
      $region23: #{tpu_custom_call.1} parent=5 // pred_region
        // Predicated region
        $region25: #{tpu_custom_call.1} parent=23 // pred_check
          %p168 = pneg %p51
        $region26: #{tpu_custom_call.1} parent=23 // pred_check_branch
          %170 = sbr.rel (%p168) target = $region28
        $region27: #{tpu_custom_call.1} parent=23 // pred_region
          %s171 = sand.u32 %s41, 1
          %s172 = scalar_lea.sflag [#allocation3], %s171
          %s173 = sand.u32 %s41, 1
          %s174 = smul.addr %s173, 8
          %s175 = scalar_lea.vmem [#allocation2], %s174
          %s177 = ssub.s32 128, 128
          %178 = vsyncadd %s172, %s177
          %s179 = smul.addr %s24, 4
          %s180 = sadd.s32 %s25, %s179
          %s181 = smul.addr %s180, 32
          %s182 = scalar_lea.hbm %s0, %s181
          %s183 = sshll.u32 %s175, 4
          %s184 = int_to_ptr.vmem [resolvable:$true] %s183
          %189 = dma.hbm_to_vmem [thread:$0]  %s182, 128, %s184, %s172, 32, 32, 2
        $region28: #{tpu_custom_call.1} parent=23 // pred_fallthru
          _
      $region24: #{tpu_custom_call.1} parent=5 // pred_fallthru
        _
      %p190 = scmp.le.s32.totalorder 1, %s17
      %p191 = scmp.lt.s32.totalorder %s17, 3
      %p192 = pnand %p190, %p191
      %p193 = pneg %p192
      // Predicated region
      $region29: #{tpu_custom_call.1} parent=5 // pred_check
        _
      $region30: #{tpu_custom_call.1} parent=5 // pred_check_branch
        %195 = sbr.rel (%p192) target = $region32
      $region31: #{tpu_custom_call.1} parent=5 // pred_region
        %s196 = ssub.s32 %s17, 1
        %s197 = sand.u32 %s44, 1
        %s198 = scalar_lea.sflag [#allocation3], %s197
        %s199 = sand.u32 %s44, 1
        %s200 = smul.addr %s199, 8
        %s201 = scalar_lea.vmem [#allocation2], %s200
        // Predicated region
        $region33: #{tpu_custom_call.1} parent=31 // pred_check
          %p202 = pneg %p57
        $region34: #{tpu_custom_call.1} parent=31 // pred_check_branch
          %204 = sbr.rel (%p202) target = $region36
        $region35: #{tpu_custom_call.1} parent=31 // pred_region
          %205 = dma.done %s198, 128
        $region36: #{tpu_custom_call.1} parent=31 // pred_fallthru
          _
        // Predicated region
        $region37: #{tpu_custom_call.1} parent=31 // pred_check
          %p206 = pneg %p78
        $region38: #{tpu_custom_call.1} parent=31 // pred_check_branch
          %208 = sbr.rel (%p206) target = $region40
        $region39: #{tpu_custom_call.1} parent=31 // pred_region
          %209 = dma.done [#allocation5], 16
        $region40: #{tpu_custom_call.1} parent=31 // pred_fallthru
          _
        // Predicated region
        $region41: #{tpu_custom_call.1} parent=31 // pred_check
          %p210 = pneg %p99
        $region42: #{tpu_custom_call.1} parent=31 // pred_check_branch
          %212 = sbr.rel (%p210) target = $region44
        $region43: #{tpu_custom_call.1} parent=31 // pred_region
          %213 = dma.done [#allocation8], 16
        $region44: #{tpu_custom_call.1} parent=31 // pred_fallthru
          _
        %214 = sfence
        %s215 = sand.u32 %s44, 1
        %s216 = scalar_lea.sflag [#allocation3], %s215
        %s217 = sand.u32 %s44, 1
        %s218 = smul.addr %s217, 8
        %s219 = scalar_lea.vmem [#allocation2], %s218
        %p220 = pneg %p57
        %p221 = pneg %p54
        %p222 = pneg %p78
        %p223 = pneg %p75
        %p224 = pneg %p99
        %p225 = pneg %p96
        %p226 = pneg %p127
        %p227 = pneg %p124
        %s228 = sand.u32 %s114, 1
        %s229 = scalar_lea.sflag [#allocation4], %s228
        %s230 = sand.u32 %s114, 1
        %s231 = smul.addr %s230, 6
        %s232 = scalar_lea.vmem [#allocation9], %s231
        %s233 = sld [smem:[#allocation6]]
        %s234 = sld [smem:[#allocation6 + $0x1]]
        %s235 = sld [smem:[#allocation6 + $0x2]]
        %s236 = sld [smem:[#allocation6 + $0x3]]
        %s237 = sld [smem:[#allocation6 + $0x4]]
        %s238 = sld [smem:[#allocation6 + $0x5]]
        %s239 = sld [smem:[#allocation6 + $0x6]]
        %s240 = sld [smem:[#allocation6 + $0x7]]
        %s241 = sld [smem:[#allocation6 + $0x8]]
        %s242 = sld [smem:[#allocation6 + $0x9]]
        %s243 = sld [smem:[#allocation6 + $0xa]]
        %s244 = sld [smem:[#allocation6 + $0xb]]
        %s245 = sld [smem:[#allocation7]]
        %v246 = vstv %s245
        %s247 = sld [smem:[#allocation7 + $0x1]]
        %v248 = vstv %s247
        %s249 = sld [smem:[#allocation7 + $0x2]]
        %v250 = vstv %s249
        %v251 = vld [vmem:[%s201] sm:$0x3]
        %s252 = scalar_lea.vmem %s201, 2 [#allocation2]
        %v253 = vld [vmem:[%s252] sm:$0x3]
        %s254 = scalar_lea.vmem %s201, 4 [#allocation2]
        %v255 = vld [vmem:[%s254] sm:$0x3]
        %s256 = scalar_lea.vmem %s201, 6 [#allocation2]
        %v257 = vld [vmem:[%s256] sm:$0x3]
        %v258 = vstv %s233
        %v259 = vmul.f32 %v258, %v251
        %v260 = vadd.f32 %v246, %v259
        %v261 = vstv %s234
        %v262 = vmul.f32 %v261, %v253
        %v263 = vadd.f32 %v260, %v262
        %v264 = vstv %s235
        %v265 = vmul.f32 %v264, %v255
        %v266 = vadd.f32 %v263, %v265
        %v267 = vstv %s236
        %v268 = vmul.f32 %v267, %v257
        %v269 = vadd.f32 %v266, %v268
        %270 = vst [vmem:[%s232] sm:$0x3] %v269
        %v271 = vstv %s237
        %v272 = vmul.f32 %v271, %v251
        %v273 = vadd.f32 %v248, %v272
        %v274 = vstv %s238
        %v275 = vmul.f32 %v274, %v253
        %v276 = vadd.f32 %v273, %v275
        %v277 = vstv %s239
        %v278 = vmul.f32 %v277, %v255
        %v279 = vadd.f32 %v276, %v278
        %v280 = vstv %s240
        %v281 = vmul.f32 %v280, %v257
        %v282 = vadd.f32 %v279, %v281
        %s283 = scalar_lea.vmem %s232, 2 [#allocation9]
        %284 = vst [vmem:[%s283] sm:$0x3] %v282
        %v285 = vstv %s241
        %v286 = vmul.f32 %v285, %v251
        %v287 = vadd.f32 %v250, %v286
        %v288 = vstv %s242
        %v289 = vmul.f32 %v288, %v253
        %v290 = vadd.f32 %v287, %v289
        %v291 = vstv %s243
        %v292 = vmul.f32 %v291, %v255
        %v293 = vadd.f32 %v290, %v292
        %v294 = vstv %s244
        %v295 = vmul.f32 %v294, %v257
        %v296 = vadd.f32 %v293, %v295
        %s297 = scalar_lea.vmem %s232, 4 [#allocation9]
        %298 = vst [vmem:[%s297] sm:$0x3] %v296
        %s299 = sand.u32 %s114, 1
        %s300 = scalar_lea.sflag [#allocation4], %s299
        %s301 = sand.u32 %s114, 1
        %s302 = smul.addr %s301, 6
        %s303 = scalar_lea.vmem [#allocation9], %s302
        // Predicated region
        $region45: #{tpu_custom_call.1} parent=31 // pred_check
          %p304 = pneg %p124
        $region46: #{tpu_custom_call.1} parent=31 // pred_check_branch
          %306 = sbr.rel (%p304) target = $region48
        $region47: #{tpu_custom_call.1} parent=31 // pred_region
          %s308 = ssub.s32 96, 96
          %309 = vsyncadd %s300, %s308
          %s310 = smul.addr %s26, 3
          %s311 = sadd.s32 %s27, %s310
          %s312 = smul.addr %s311, 32
          %s313 = scalar_lea.hbm %s3, %s312
          %s314 = sshll.u32 %s303, 4
          %s315 = int_to_ptr.vmem [resolvable:$true] %s314
          %320 = dma.vmem_to_hbm [thread:$0]  %s315, 96, %s313, %s300, 32, 32, 2
        $region48: #{tpu_custom_call.1} parent=31 // pred_fallthru
          _
      $region32: #{tpu_custom_call.1} parent=5 // pred_fallthru
        _
      %p321 = scmp.le.s32.totalorder 2, %s17
      // Predicated region
      $region49: #{tpu_custom_call.1} parent=5 // pred_check
        %p322 = pneg %p321
      $region50: #{tpu_custom_call.1} parent=5 // pred_check_branch
        %324 = sbr.rel (%p322) target = $region52
      $region51: #{tpu_custom_call.1} parent=5 // pred_region
        %s325 = ssub.s32 %s17, 2
        // Predicated region
        $region53: #{tpu_custom_call.1} parent=51 // pred_check
          %p326 = pneg %p130
        $region54: #{tpu_custom_call.1} parent=51 // pred_check_branch
          %328 = sbr.rel (%p326) target = $region56
        $region55: #{tpu_custom_call.1} parent=51 // pred_region
          %s329 = sand.u32 %s115, 1
          %s330 = scalar_lea.sflag [#allocation4], %s329
          %s331 = sand.u32 %s115, 1
          %s332 = smul.addr %s331, 6
          %s333 = scalar_lea.vmem [#allocation9], %s332
          %334 = dma.done %s330, 96
        $region56: #{tpu_custom_call.1} parent=51 // pred_fallthru
          _
      $region52: #{tpu_custom_call.1} parent=5 // pred_fallthru
        _
    $region6: #{tpu_custom_call.1} parent=1 // loop_footer
      %s21 = sadd.s32 1, %s17
    $region7: #{tpu_custom_call.1} parent=1 // loop_footer_branch
      %16 = sbr.rel target = $region3
    $region8: #{tpu_custom_call.1} parent=1 // loop_exit
      _
    %335 = vsyncpa [#allocation3], 1
    %s336 = scalar_lea.sflag [#allocation3], 1
    %337 = vsyncpa %s336, 1
    %338 = vsyncpa [#allocation4], 1
    %s339 = scalar_lea.sflag [#allocation4], 1
    %340 = vsyncpa %s339, 1
    %341 = vsyncpa [#allocation5], 1
    %s342 = scalar_lea.sflag [#allocation5], 1
    %343 = vsyncpa %s342, 1
    %344 = vsyncpa [#allocation8], 1

</llo_original>
